<compile_context>
chip_gen: v7x
topology: tpu7x:2x2x1
jax: 0.10.0
libtpu: 0.0.40
codegen_flags: <defaults>
</compile_context>

<pallas_src>
import functools

import jax
import jax.numpy as jnp
from jax.experimental import pallas as pl
from jax.experimental.pallas import tpu as pltpu


def _round_up(x, m):
    return (x + m - 1) // m * m


# ----------------------------------------------------------------------------
# Pallas kernel: one grid step = one batch element, full (C, H*W) plane.
# ----------------------------------------------------------------------------
def _mnas_block_kernel(x_ref, w1_ref, b1_ref, wdw_ref, b2_ref, w3_ref, b3_ref,
                       o_ref, *, H, W, is_add):
    S = H * W
    Cexp = w1_ref.shape[0]

    x = x_ref[0]                                            # (Cin, S)

    # ---- unCompressConv1x1 (+ folded BN + ReLU): MXU -----------------------
    h1 = jnp.dot(w1_ref[...], x.astype(w1_ref.dtype),
                 preferred_element_type=jnp.float32)        # (Cexp, S) f32
    h1 = jnp.maximum(h1 + b1_ref[...], 0.0)

    # ---- DepthwiseConv 3x3, stride=1, padding=1 (+ folded BN + ReLU): VPU --
    # Zero halo along the lane axis, rounded to a 128-lane tile so the
    # concatenate pieces land on aligned offsets.  Row (top/bottom) borders are
    # handled by the zero halo; column (left/right) borders by a lane mask.
    halo = _round_up(W + 1, 128)
    zpad = jnp.zeros((Cexp, halo), jnp.float32)
    hp = jnp.concatenate([zpad, h1, zpad], axis=1)          # (Cexp, S + 2*halo)

    col = jax.lax.broadcasted_iota(jnp.int32, (Cexp, S), 1) % W
    wdw = wdw_ref[...].astype(jnp.float32)                  # (Cexp, 9)
    acc = jnp.zeros((Cexp, S), jnp.float32)
    for dy in (-1, 0, 1):
        for dx in (-1, 0, 1):
            off = dy * W + dx
            shifted = hp[:, halo + off:halo + off + S]      # = h1[:, s + off]
            if dx == 1:      # output col j reads j+1 -> invalid at j == W-1
                shifted = jnp.where(col < W - 1, shifted, 0.0)
            elif dx == -1:   # output col j reads j-1 -> invalid at j == 0
                shifted = jnp.where(col > 0, shifted, 0.0)
            k = (dy + 1) * 3 + (dx + 1)
            tap = wdw[:, k:k + 1]                           # (Cexp, 1)
            acc = acc + shifted * tap
    h2 = jnp.maximum(acc + b2_ref[...], 0.0)

    # ---- CompressConv1x1 (+ folded BN + ReLU): MXU -------------------------
    h3 = jnp.dot(w3_ref[...], h2.astype(w3_ref.dtype),
                 preferred_element_type=jnp.float32)        # (Cout, S) f32
    h3 = jnp.maximum(h3 + b3_ref[...], 0.0)

    # ---- residual add (x += input), as in the PyTorch module ---------------
    if is_add:
        h3 = h3 + x.astype(jnp.float32)

    o_ref[0] = h3.astype(o_ref.dtype)


# ----------------------------------------------------------------------------
# Wrapper: NCHW in/out; internally (N, C, H*W) which is a free reshape.
# ----------------------------------------------------------------------------
def mnas_block_forward(x_nchw, params, *, is_add=True, interpret=False):
    N, Cin, H, W = x_nchw.shape
    S = H * W
    Cexp = params["w1"].shape[0]
    Cout = params["w3"].shape[0]
    if is_add and Cin != Cout:
        raise ValueError("residual add requires in_channels == out_channels")
    # TODO(synk): stride > 1 depthwise conv not implemented (the residual form
    # of this block requires stride=1 anyway).
    # TODO(synk): for very large H*W, add a second grid axis tiling S with a
    # +/-(W+1) halo so per-step VMEM residency stays bounded.

    x = x_nchw.reshape(N, Cin, S)   # free view of NCHW row-major data

    kernel = functools.partial(_mnas_block_kernel, H=H, W=W, is_add=is_add)

    # Explicit VMEM budget: double-buffered I/O blocks + in-kernel temporaries,
    # with margin (capped well under every generation's physical VMEM).
    halo = _round_up(W + 1, 128)
    est = 4 * (2 * Cin * S + 2 * Cout * S + 2 * Cexp * (S + 2 * halo)
               + 12 * Cexp * S) + (1 << 20)
    vmem_limit = int(min(32 * 1024 * 1024, max(4 * 1024 * 1024, 2 * est)))

    grid_spec = pltpu.PrefetchScalarGridSpec(
        num_scalar_prefetch=0,
        grid=(N,),
        in_specs=[
            pl.BlockSpec((1, Cin, S), lambda n: (n, 0, 0)),   # x
            pl.BlockSpec((Cexp, Cin), lambda n: (0, 0)),      # w1 (BN folded)
            pl.BlockSpec((Cexp, 1), lambda n: (0, 0)),        # b1
            pl.BlockSpec((Cexp, 9), lambda n: (0, 0)),        # depthwise taps
            pl.BlockSpec((Cexp, 1), lambda n: (0, 0)),        # b2
            pl.BlockSpec((Cout, Cexp), lambda n: (0, 0)),     # w3 (BN folded)
            pl.BlockSpec((Cout, 1), lambda n: (0, 0)),        # b3
        ],
        out_specs=pl.BlockSpec((1, Cout, S), lambda n: (n, 0, 0)),
    )

    out = pl.pallas_call(
        kernel,
        out_shape=jax.ShapeDtypeStruct((N, Cout, S), x_nchw.dtype),
        grid_spec=grid_spec,
        compiler_params=pltpu.CompilerParams(
            dimension_semantics=("parallel",),   # batch steps are independent
            vmem_limit_bytes=vmem_limit),
        interpret=interpret,
    )(x, params["w1"], params["b1"], params["wdw"], params["b2"],
      params["w3"], params["b3"])

    return out.reshape(N, Cout, H, W)


# ----------------------------------------------------------------------------
# Parameter construction (PyTorch layouts) and BN folding for the kernel.
# ----------------------------------------------------------------------------
def init_raw_params(key, in_channels, out_channels, ratio=6):
    cexp = out_channels * ratio
    ks = jax.random.split(key, 6)

    def bn_init(k, c):
        kg, kb, km, kv = jax.random.split(k, 4)
        return dict(
            gamma=0.5 + jax.random.uniform(kg, (c,), jnp.float32),
            beta=0.1 * jax.random.normal(kb, (c,), jnp.float32),
            mean=0.1 * jax.random.normal(km, (c,), jnp.float32),
            var=0.5 + jax.random.uniform(kv, (c,), jnp.float32))

    return dict(
        w1=0.1 * jax.random.normal(ks[0], (cexp, in_channels, 1, 1), jnp.float32),
        wdw=0.1 * jax.random.normal(ks[1], (cexp, 1, 3, 3), jnp.float32),
        w3=0.1 * jax.random.normal(ks[2], (out_channels, cexp, 1, 1), jnp.float32),
        bn1=bn_init(ks[3], cexp),
        bn2=bn_init(ks[4], cexp),
        bn3=bn_init(ks[5], out_channels))


def fold_params(raw, *, eps=1e-5, mm_dtype=jnp.bfloat16):
    """Fold inference-mode BN into conv weights; keep only per-channel biases."""
    def fold(bn):
        s = bn["gamma"] / jnp.sqrt(bn["var"] + eps)
        return s, bn["beta"] - bn["mean"] * s

    s1, b1 = fold(raw["bn1"])
    s2, b2 = fold(raw["bn2"])
    s3, b3 = fold(raw["bn3"])
    cexp = raw["w1"].shape[0]
    cout = raw["w3"].shape[0]
    return dict(
        # Matmul weights in bf16 (MXU-native), depthwise taps + biases in f32
        # (VPU epilogue stays f32 on all generations, incl. v5e).
        w1=(raw["w1"][:, :, 0, 0] * s1[:, None]).astype(mm_dtype),   # (Cexp, Cin)
        b1=b1.reshape(cexp, 1).astype(jnp.float32),
        wdw=(raw["wdw"][:, 0].reshape(cexp, 9) * s2[:, None]).astype(jnp.float32),
        b2=b2.reshape(cexp, 1).astype(jnp.float32),
        w3=(raw["w3"][:, :, 0, 0] * s3[:, None]).astype(mm_dtype),   # (Cout, Cexp)
        b3=b3.reshape(cout, 1).astype(jnp.float32))


# ----------------------------------------------------------------------------
# Pure-JAX f32 reference mirroring the PyTorch module exactly (eval-mode BN).
# ----------------------------------------------------------------------------
def ref_forward(x_nchw, raw, *, eps=1e-5, is_add=True):
    N, Cin, H, W = x_nchw.shape

    def bn(h, p):
        sh = (1, -1, 1, 1)
        return ((h - p["mean"].reshape(sh))
                / jnp.sqrt(p["var"] + eps).reshape(sh)
                * p["gamma"].reshape(sh) + p["beta"].reshape(sh))

    h = jnp.einsum("nchw,ec->nehw", x_nchw, raw["w1"][:, :, 0, 0])
    h = jax.nn.relu(bn(h, raw["bn1"]))
    hp = jnp.pad(h, ((0, 0), (0, 0), (1, 1), (1, 1)))
    acc = jnp.zeros_like(h)
    for di in range(3):
        for dj in range(3):
            w = raw["wdw"][:, 0, di, dj].reshape(1, -1, 1, 1)
            acc = acc + hp[:, :, di:di + H, dj:dj + W] * w
    h = jax.nn.relu(bn(acc, raw["bn2"]))
    h = jnp.einsum("nehw,oe->nohw", h, raw["w3"][:, :, 0, 0])
    h = jax.nn.relu(bn(h, raw["bn3"]))
    return h + x_nchw if is_add else h


if __name__ == "__main__":
    # Small shapes: batch=2, in=out channels=4, spatial=16x16, ratio=6.
    N, C, H, W = 2, 4, 16, 16
    key = jax.random.PRNGKey(0)
    k_x, k_p = jax.random.split(key)
    x = jax.random.normal(k_x, (N, C, H, W), jnp.float32)

    raw = init_raw_params(k_p, in_channels=C, out_channels=C, ratio=6)
    params = fold_params(raw)

    out = mnas_block_forward(x, params, is_add=True)
    out = jax.block_until_ready(out)

    ref = ref_forward(x, raw, is_add=True)
    assert out.shape == (N, C, H, W)
    max_err = float(jnp.max(jnp.abs(out - ref)))
    # bf16 MXU inputs with f32 accumulation -> small deviation vs all-f32 ref.
    assert jnp.allclose(out, ref, atol=3e-2, rtol=3e-2), max_err
    print("KERNEL_OK")
</pallas_src>

<mosaic_0001>
module attributes {stable_mosaic.version = 11 : i64} {
  func.func @_mnas_block_kernel(%arg0: i32, %arg1: memref<1x4x256xf32, #tpu.memory_space<vmem>>, %arg2: memref<24x4xbf16, #tpu.memory_space<vmem>>, %arg3: memref<24x1xf32, #tpu.memory_space<vmem>>, %arg4: memref<24x9xf32, #tpu.memory_space<vmem>>, %arg5: memref<24x1xf32, #tpu.memory_space<vmem>>, %arg6: memref<4x24xbf16, #tpu.memory_space<vmem>>, %arg7: memref<4x1xf32, #tpu.memory_space<vmem>>, %arg8: memref<1x4x256xf32, #tpu.memory_space<vmem>>) attributes {dimension_semantics = [#tpu.dimension_semantics<parallel>], iteration_bounds = array<i64: 2>, scalar_prefetch = 0 : i64, scratch_operands = 0 : i64, tpu.core_type = #tpu.core_type<tc>, window_params = [{transform_indices = @transform_0, window_bounds = array<i64: 1, 4, 256>}, {pipeline_mode = #tpu.pipeline_mode<synchronous>, transform_indices = @transform_1, window_bounds = array<i64: 24, 4>}, {pipeline_mode = #tpu.pipeline_mode<synchronous>, transform_indices = @transform_2, window_bounds = array<i64: 24, 1>}, {pipeline_mode = #tpu.pipeline_mode<synchronous>, transform_indices = @transform_3, window_bounds = array<i64: 24, 9>}, {pipeline_mode = #tpu.pipeline_mode<synchronous>, transform_indices = @transform_4, window_bounds = array<i64: 24, 1>}, {pipeline_mode = #tpu.pipeline_mode<synchronous>, transform_indices = @transform_5, window_bounds = array<i64: 4, 24>}, {pipeline_mode = #tpu.pipeline_mode<synchronous>, transform_indices = @transform_6, window_bounds = array<i64: 4, 1>}, {transform_indices = @transform_7, window_bounds = array<i64: 1, 4, 256>}]} {
    %c0 = arith.constant 0 : index
    %c0_0 = arith.constant 0 : index
    %c0_1 = arith.constant 0 : index
    %0 = vector.load %arg1[%c0, %c0_0, %c0_1] : memref<1x4x256xf32, #tpu.memory_space<vmem>>, vector<1x4x256xf32>
    %1 = vector.shape_cast %0 : vector<1x4x256xf32> to vector<4x256xf32>
    %c0_2 = arith.constant 0 : index
    %c0_3 = arith.constant 0 : index
    %2 = vector.load %arg2[%c0_2, %c0_3] : memref<24x4xbf16, #tpu.memory_space<vmem>>, vector<24x4xbf16>
    %3 = arith.truncf %1 : vector<4x256xf32> to vector<4x256xbf16>
    %cst = arith.constant dense<0.000000e+00> : vector<24x256xf32>
    %4 = tpu.matmul %2, %3, %cst {dimension_numbers = #tpu.dot_dimension_numbers<[1], [0], [0], [1], [0, 0, 1, 1], [], []>} : vector<24x4xbf16>, vector<4x256xbf16>, vector<24x256xf32> -> vector<24x256xf32>
    %c0_4 = arith.constant 0 : index
    %c0_5 = arith.constant 0 : index
    %5 = vector.load %arg3[%c0_4, %c0_5] : memref<24x1xf32, #tpu.memory_space<vmem>>, vector<24x1xf32>
    %6 = vector.broadcast %5 : vector<24x1xf32> to vector<24x256xf32>
    %7 = arith.addf %4, %6 : vector<24x256xf32>
    %cst_6 = arith.constant 0.000000e+00 : f32
    %8 = vector.broadcast %cst_6 : f32 to vector<24x256xf32>
    %9 = arith.maximumf %7, %8 : vector<24x256xf32>
    %cst_7 = arith.constant 0.000000e+00 : f32
    %10 = vector.broadcast %cst_7 : f32 to vector<24x128xf32>
    %11 = tpu.concatenate %10, %9, %10 in 1 : vector<24x128xf32>, vector<24x256xf32>, vector<24x128xf32> -> vector<24x512xf32>
    %12 = tpu.iota {dimensions = array<i32: 1>} : vector<24x256xi32>
    %c16_i32 = arith.constant 16 : i32
    %c0_i32 = arith.constant 0 : i32
    %13 = arith.cmpi eq, %c16_i32, %c0_i32 : i32
    %c1_i32 = arith.constant 1 : i32
    %14 = arith.select %13, %c1_i32, %c16_i32 : i32
    %15 = vector.broadcast %14 : i32 to vector<24x256xi32>
    %16 = arith.remsi %12, %15 : vector<24x256xi32>
    %c0_i32_8 = arith.constant 0 : i32
    %17 = vector.broadcast %c0_i32_8 : i32 to vector<24x256xi32>
    %18 = arith.cmpi ne, %16, %17 : vector<24x256xi32>
    %c0_i32_9 = arith.constant 0 : i32
    %19 = vector.broadcast %c0_i32_9 : i32 to vector<24x256xi32>
    %20 = arith.cmpi slt, %16, %19 : vector<24x256xi32>
    %c0_i32_10 = arith.constant 0 : i32
    %21 = arith.cmpi slt, %14, %c0_i32_10 : i32
    %22 = vector.broadcast %21 : i1 to vector<24x256xi1>
    %23 = vector.broadcast %22 : vector<24x256xi1> to vector<24x256xi1>
    %24 = arith.xori %20, %23 : vector<24x256xi1>
    %25 = arith.andi %24, %18 : vector<24x256xi1>
    %26 = vector.broadcast %14 : i32 to vector<24x256xi32>
    %27 = arith.addi %16, %26 : vector<24x256xi32>
    %28 = arith.select %25, %27, %16 : vector<24x256xi1>, vector<24x256xi32>
    %c0_11 = arith.constant 0 : index
    %c0_12 = arith.constant 0 : index
    %29 = vector.load %arg4[%c0_11, %c0_12] : memref<24x9xf32, #tpu.memory_space<vmem>>, vector<24x9xf32>
    %cst_13 = arith.constant 0.000000e+00 : f32
    %30 = vector.broadcast %cst_13 : f32 to vector<24x256xf32>
    %31 = vector.extract_strided_slice %11 {offsets = [0, 111], sizes = [24, 256], strides = [1, 1]} : vector<24x512xf32> to vector<24x256xf32>
    %c0_i32_14 = arith.constant 0 : i32
    %32 = vector.broadcast %c0_i32_14 : i32 to vector<24x256xi32>
    %33 = arith.cmpi sgt, %28, %32 : vector<24x256xi32>
    %cst_15 = arith.constant 0.000000e+00 : f32
    %34 = vector.broadcast %cst_15 : f32 to vector<24x256xf32>
    %35 = arith.select %33, %31, %34 : vector<24x256xi1>, vector<24x256xf32>
    %36 = vector.extract_strided_slice %29 {offsets = [0, 0], sizes = [24, 1], strides = [1, 1]} : vector<24x9xf32> to vector<24x1xf32>
    %37 = vector.broadcast %36 : vector<24x1xf32> to vector<24x256xf32>
    %38 = arith.mulf %35, %37 : vector<24x256xf32>
    %39 = arith.addf %30, %38 : vector<24x256xf32>
    %40 = vector.extract_strided_slice %11 {offsets = [0, 112], sizes = [24, 256], strides = [1, 1]} : vector<24x512xf32> to vector<24x256xf32>
    %41 = vector.extract_strided_slice %29 {offsets = [0, 1], sizes = [24, 1], strides = [1, 1]} : vector<24x9xf32> to vector<24x1xf32>
    %42 = vector.broadcast %41 : vector<24x1xf32> to vector<24x256xf32>
    %43 = arith.mulf %40, %42 : vector<24x256xf32>
    %44 = arith.addf %39, %43 : vector<24x256xf32>
    %45 = vector.extract_strided_slice %11 {offsets = [0, 113], sizes = [24, 256], strides = [1, 1]} : vector<24x512xf32> to vector<24x256xf32>
    %c15_i32 = arith.constant 15 : i32
    %46 = vector.broadcast %c15_i32 : i32 to vector<24x256xi32>
    %47 = arith.cmpi slt, %28, %46 : vector<24x256xi32>
    %cst_16 = arith.constant 0.000000e+00 : f32
    %48 = vector.broadcast %cst_16 : f32 to vector<24x256xf32>
    %49 = arith.select %47, %45, %48 : vector<24x256xi1>, vector<24x256xf32>
    %50 = vector.extract_strided_slice %29 {offsets = [0, 2], sizes = [24, 1], strides = [1, 1]} : vector<24x9xf32> to vector<24x1xf32>
    %51 = vector.broadcast %50 : vector<24x1xf32> to vector<24x256xf32>
    %52 = arith.mulf %49, %51 : vector<24x256xf32>
    %53 = arith.addf %44, %52 : vector<24x256xf32>
    %54 = vector.extract_strided_slice %11 {offsets = [0, 127], sizes = [24, 256], strides = [1, 1]} : vector<24x512xf32> to vector<24x256xf32>
    %c0_i32_17 = arith.constant 0 : i32
    %55 = vector.broadcast %c0_i32_17 : i32 to vector<24x256xi32>
    %56 = arith.cmpi sgt, %28, %55 : vector<24x256xi32>
    %cst_18 = arith.constant 0.000000e+00 : f32
    %57 = vector.broadcast %cst_18 : f32 to vector<24x256xf32>
    %58 = arith.select %56, %54, %57 : vector<24x256xi1>, vector<24x256xf32>
    %59 = vector.extract_strided_slice %29 {offsets = [0, 3], sizes = [24, 1], strides = [1, 1]} : vector<24x9xf32> to vector<24x1xf32>
    %60 = vector.broadcast %59 : vector<24x1xf32> to vector<24x256xf32>
    %61 = arith.mulf %58, %60 : vector<24x256xf32>
    %62 = arith.addf %53, %61 : vector<24x256xf32>
    %63 = vector.extract_strided_slice %11 {offsets = [0, 128], sizes = [24, 256], strides = [1, 1]} : vector<24x512xf32> to vector<24x256xf32>
    %64 = vector.extract_strided_slice %29 {offsets = [0, 4], sizes = [24, 1], strides = [1, 1]} : vector<24x9xf32> to vector<24x1xf32>
    %65 = vector.broadcast %64 : vector<24x1xf32> to vector<24x256xf32>
    %66 = arith.mulf %63, %65 : vector<24x256xf32>
    %67 = arith.addf %62, %66 : vector<24x256xf32>
    %68 = vector.extract_strided_slice %11 {offsets = [0, 129], sizes = [24, 256], strides = [1, 1]} : vector<24x512xf32> to vector<24x256xf32>
    %c15_i32_19 = arith.constant 15 : i32
    %69 = vector.broadcast %c15_i32_19 : i32 to vector<24x256xi32>
    %70 = arith.cmpi slt, %28, %69 : vector<24x256xi32>
    %cst_20 = arith.constant 0.000000e+00 : f32
    %71 = vector.broadcast %cst_20 : f32 to vector<24x256xf32>
    %72 = arith.select %70, %68, %71 : vector<24x256xi1>, vector<24x256xf32>
    %73 = vector.extract_strided_slice %29 {offsets = [0, 5], sizes = [24, 1], strides = [1, 1]} : vector<24x9xf32> to vector<24x1xf32>
    %74 = vector.broadcast %73 : vector<24x1xf32> to vector<24x256xf32>
    %75 = arith.mulf %72, %74 : vector<24x256xf32>
    %76 = arith.addf %67, %75 : vector<24x256xf32>
    %77 = vector.extract_strided_slice %11 {offsets = [0, 143], sizes = [24, 256], strides = [1, 1]} : vector<24x512xf32> to vector<24x256xf32>
    %c0_i32_21 = arith.constant 0 : i32
    %78 = vector.broadcast %c0_i32_21 : i32 to vector<24x256xi32>
    %79 = arith.cmpi sgt, %28, %78 : vector<24x256xi32>
    %cst_22 = arith.constant 0.000000e+00 : f32
    %80 = vector.broadcast %cst_22 : f32 to vector<24x256xf32>
    %81 = arith.select %79, %77, %80 : vector<24x256xi1>, vector<24x256xf32>
    %82 = vector.extract_strided_slice %29 {offsets = [0, 6], sizes = [24, 1], strides = [1, 1]} : vector<24x9xf32> to vector<24x1xf32>
    %83 = vector.broadcast %82 : vector<24x1xf32> to vector<24x256xf32>
    %84 = arith.mulf %81, %83 : vector<24x256xf32>
    %85 = arith.addf %76, %84 : vector<24x256xf32>
    %86 = vector.extract_strided_slice %11 {offsets = [0, 144], sizes = [24, 256], strides = [1, 1]} : vector<24x512xf32> to vector<24x256xf32>
    %87 = vector.extract_strided_slice %29 {offsets = [0, 7], sizes = [24, 1], strides = [1, 1]} : vector<24x9xf32> to vector<24x1xf32>
    %88 = vector.broadcast %87 : vector<24x1xf32> to vector<24x256xf32>
    %89 = arith.mulf %86, %88 : vector<24x256xf32>
    %90 = arith.addf %85, %89 : vector<24x256xf32>
    %91 = vector.extract_strided_slice %11 {offsets = [0, 145], sizes = [24, 256], strides = [1, 1]} : vector<24x512xf32> to vector<24x256xf32>
    %c15_i32_23 = arith.constant 15 : i32
    %92 = vector.broadcast %c15_i32_23 : i32 to vector<24x256xi32>
    %93 = arith.cmpi slt, %28, %92 : vector<24x256xi32>
    %cst_24 = arith.constant 0.000000e+00 : f32
    %94 = vector.broadcast %cst_24 : f32 to vector<24x256xf32>
    %95 = arith.select %93, %91, %94 : vector<24x256xi1>, vector<24x256xf32>
    %96 = vector.extract_strided_slice %29 {offsets = [0, 8], sizes = [24, 1], strides = [1, 1]} : vector<24x9xf32> to vector<24x1xf32>
    %97 = vector.broadcast %96 : vector<24x1xf32> to vector<24x256xf32>
    %98 = arith.mulf %95, %97 : vector<24x256xf32>
    %99 = arith.addf %90, %98 : vector<24x256xf32>
    %c0_25 = arith.constant 0 : index
    %c0_26 = arith.constant 0 : index
    %100 = vector.load %arg5[%c0_25, %c0_26] : memref<24x1xf32, #tpu.memory_space<vmem>>, vector<24x1xf32>
    %101 = vector.broadcast %100 : vector<24x1xf32> to vector<24x256xf32>
    %102 = arith.addf %99, %101 : vector<24x256xf32>
    %cst_27 = arith.constant 0.000000e+00 : f32
    %103 = vector.broadcast %cst_27 : f32 to vector<24x256xf32>
    %104 = arith.maximumf %102, %103 : vector<24x256xf32>
    %c0_28 = arith.constant 0 : index
    %c0_29 = arith.constant 0 : index
    %105 = vector.load %arg6[%c0_28, %c0_29] : memref<4x24xbf16, #tpu.memory_space<vmem>>, vector<4x24xbf16>
    %106 = arith.truncf %104 : vector<24x256xf32> to vector<24x256xbf16>
    %cst_30 = arith.constant dense<0.000000e+00> : vector<4x256xf32>
    %107 = tpu.matmul %105, %106, %cst_30 {dimension_numbers = #tpu.dot_dimension_numbers<[1], [0], [0], [1], [0, 0, 1, 1], [], []>} : vector<4x24xbf16>, vector<24x256xbf16>, vector<4x256xf32> -> vector<4x256xf32>
    %c0_31 = arith.constant 0 : index
    %c0_32 = arith.constant 0 : index
    %108 = vector.load %arg7[%c0_31, %c0_32] : memref<4x1xf32, #tpu.memory_space<vmem>>, vector<4x1xf32>
    %109 = vector.broadcast %108 : vector<4x1xf32> to vector<4x256xf32>
    %110 = arith.addf %107, %109 : vector<4x256xf32>
    %cst_33 = arith.constant 0.000000e+00 : f32
    %111 = vector.broadcast %cst_33 : f32 to vector<4x256xf32>
    %112 = arith.maximumf %110, %111 : vector<4x256xf32>
    %113 = arith.addf %112, %1 : vector<4x256xf32>
    %c0_34 = arith.constant 0 : index
    %c0_35 = arith.constant 0 : index
    %c0_36 = arith.constant 0 : index
    %114 = vector.load %arg8[%c0_34, %c0_35, %c0_36] : memref<1x4x256xf32, #tpu.memory_space<vmem>>, vector<1x4x256xf32>
    %115 = vector.shape_cast %114 : vector<1x4x256xf32> to vector<4x256xf32>
    %116 = vector.shape_cast %113 : vector<4x256xf32> to vector<1x4x256xf32>
    tpu.vector_store %arg8[%c0_34, %c0_35, %c0_36], %116 {strides = array<i32>} : memref<1x4x256xf32, #tpu.memory_space<vmem>>, vector<1x4x256xf32>,
    return
  }
  func.func @transform_0(%arg0: i32) -> (i32, i32, i32) {
    %c0_i32 = arith.constant 0 : i32
    %c0_i32_0 = arith.constant 0 : i32
    %c0_i32_1 = arith.constant 0 : i32
    return %arg0, %c0_i32, %c0_i32_0 : i32, i32, i32
  }
  func.func @transform_1(%arg0: i32) -> (i32, i32) {
    %c0_i32 = arith.constant 0 : i32
    %c0_i32_0 = arith.constant 0 : i32
    %c0_i32_1 = arith.constant 0 : i32
    return %c0_i32, %c0_i32_0 : i32, i32
  }
  func.func @transform_2(%arg0: i32) -> (i32, i32) {
    %c0_i32 = arith.constant 0 : i32
    %c0_i32_0 = arith.constant 0 : i32
    %c0_i32_1 = arith.constant 0 : i32
    return %c0_i32, %c0_i32_0 : i32, i32
  }
  func.func @transform_3(%arg0: i32) -> (i32, i32) {
    %c0_i32 = arith.constant 0 : i32
    %c0_i32_0 = arith.constant 0 : i32
    %c0_i32_1 = arith.constant 0 : i32
    return %c0_i32, %c0_i32_0 : i32, i32
  }
  func.func @transform_4(%arg0: i32) -> (i32, i32) {
    %c0_i32 = arith.constant 0 : i32
    %c0_i32_0 = arith.constant 0 : i32
    %c0_i32_1 = arith.constant 0 : i32
    return %c0_i32, %c0_i32_0 : i32, i32
  }
  func.func @transform_5(%arg0: i32) -> (i32, i32) {
    %c0_i32 = arith.constant 0 : i32
    %c0_i32_0 = arith.constant 0 : i32
    %c0_i32_1 = arith.constant 0 : i32
    return %c0_i32, %c0_i32_0 : i32, i32
  }
  func.func @transform_6(%arg0: i32) -> (i32, i32) {
    %c0_i32 = arith.constant 0 : i32
    %c0_i32_0 = arith.constant 0 : i32
    %c0_i32_1 = arith.constant 0 : i32
    return %c0_i32, %c0_i32_0 : i32, i32
  }
  func.func @transform_7(%arg0: i32) -> (i32, i32, i32) {
    %c0_i32 = arith.constant 0 : i32
    %c0_i32_0 = arith.constant 0 : i32
    %c0_i32_1 = arith.constant 0 : i32
    return %arg0, %c0_i32, %c0_i32_0 : i32, i32, i32
  }
}

</mosaic_0001>

<llo_original>
// kernel: tpu_custom_call.1
$region0: #{tpu_custom_call.1}
  #allocation0 [shape = 'u32[]', space=smem, size = 0x4, offset = 0x4, fixed_abs, tag = 'smem constant byte address 0x4 - core index']
  #allocation1 [shape = 'u32[144,128]{1,0:T(1,128)}', space=vmem, size = 0x12000, scoped, tag = 'internal scratch']
  %s0 = inlined_call_operand.vmem [shape: f32[2,4,256], index: 0, kind: input, shape index: {}]
  %s1 = inlined_call_operand.vmem [shape: bf16[24,4], index: 1, kind: input, shape index: {}]
  %s2 = inlined_call_operand.vmem [shape: f32[24,1], index: 2, kind: input, shape index: {}]
  %s3 = inlined_call_operand.vmem [shape: f32[24,9], index: 3, kind: input, shape index: {}]
  %s4 = inlined_call_operand.vmem [shape: f32[24,1], index: 4, kind: input, shape index: {}]
  %s5 = inlined_call_operand.vmem [shape: bf16[4,24], index: 5, kind: input, shape index: {}]
  %s6 = inlined_call_operand.vmem [shape: f32[4,1], index: 6, kind: input, shape index: {}]
  %s7 = inlined_call_operand.hbm [shape: f32[2,4,256], index: 7, kind: output, shape index: {}]
  %s8 = sld [smem:[#allocation0]]
  $region61: #{tpu_custom_call.1} parent=0
    _
  %s10 = ssub.s32 1, %s8
  %s11 = scalar_select 0, %s10, %s8
  $region1: #{tpu_custom_call.1} parent=0
    #allocation2 [shape = 'u8[8192]{0}', space=vmem, size = 0x2000, scoped, tag = 'output window, operand 0']
    #allocation3 [shape = 's32[2]{0}', space=sflag, size = 0x8, scoped, tag = 'scoped memory for tpu_custom_call.1']
    %12 = vsyncpa [#allocation3], 0
    %s13 = scalar_lea.sflag [#allocation3], 1
    %14 = vsyncpa %s13, 0
    loop: start=0, step=1, limit=4
    $region2: #{tpu_custom_call.1} parent=1 // loop_pre_header
      _
    $region3: #{tpu_custom_call.1} parent=1 // loop_header
      %s16 = sphi 0, %s20
      %p17 = scmp.ge.s32.totalorder %s16, 4
      %s26 = sphi 0, %s28
      %s29 = sphi 0, %s26
      %s30 = sphi 0, %s29
      %s46 = sphi 0, %s30
      %s50 = sphi 0, %s50
      %s52 = sphi 0, %s50
      %s53 = sphi 0, %s52
      %s67 = sphi 0, %s53
      %s71 = sphi 0, %s71
      %s73 = sphi 0, %s71
      %s74 = sphi 0, %s73
      %s88 = sphi 0, %s74
      %s92 = sphi 0, %s92
      %s94 = sphi 0, %s92
      %s95 = sphi 0, %s94
      %s109 = sphi 0, %s95
      %s113 = sphi 0, %s113
      %s115 = sphi 0, %s113
      %s116 = sphi 0, %s115
      %s130 = sphi 0, %s116
      %s134 = sphi 0, %s134
      %s136 = sphi 0, %s134
      %s137 = sphi 0, %s136
      %s151 = sphi 0, %s137
      %s155 = sphi 0, %s155
      %s157 = sphi 0, %s155
      %s158 = sphi 0, %s157
      %s172 = sphi 0, %s158
      %s178 = sphi 0, %s180
      %s181 = sphi 0, %s178
      %s182 = sphi 0, %s181
      %s198 = sphi 0, %s182
    $region4: #{tpu_custom_call.1} parent=1 // loop_header_branch
      %19 = sbr.rel (%p17) target = $region8
    $region5: #{tpu_custom_call.1} parent=1 // loop_body
      %s21 = ssub.s32 %s16, 1
      %s22 = ssub.s32 %s16, 2
      %s23 = sadd.s32 %s16, 1
      %s24 = ssub.s32 %s16, %s23
      %p25 = scmp.eq.s32.totalorder %s24, 0
      %s27 = sadd.s32 %s26, 1
      %s28 = scalar_select %p25, %s26, %s27
      %p31 = pneg %p25
      %p32 = scmp.eq.s32.totalorder %s16, 1
      %p33 = por %p31, %p32
      %p34 = scmp.ne.s32.totalorder %s26, %s29
      %p35 = scmp.eq.s32.totalorder %s16, 0
      %p36 = por %p34, %p35
      %p37 = scmp.ne.s32.totalorder %s26, %s29
      %p38 = scmp.eq.s32.totalorder %s21, 1
      %p39 = por %p37, %p38
      %p40 = scmp.ne.s32.totalorder %s29, %s30
      %p41 = scmp.eq.s32.totalorder %s21, 0
      %p42 = por %p40, %p41
      %p43 = scmp.ne.s32.totalorder %s29, %s30
      %p44 = scmp.eq.s32.totalorder %s22, 1
      %p45 = por %p43, %p44
      %p47 = scmp.ne.s32.totalorder %s30, %s46
      %p48 = scmp.eq.s32.totalorder %s22, 0
      %p49 = por %p47, %p48
      %s51 = sadd.s32 %s50, 1
      %p54 = scmp.eq.s32.totalorder %s16, 1
      %p55 = scmp.ne.s32.totalorder %s50, %s52
      %p56 = scmp.eq.s32.totalorder %s16, 0
      %p57 = por %p55, %p56
      %p58 = scmp.ne.s32.totalorder %s50, %s52
      %p59 = scmp.eq.s32.totalorder %s21, 1
      %p60 = por %p58, %p59
      %p61 = scmp.ne.s32.totalorder %s52, %s53
      %p62 = scmp.eq.s32.totalorder %s21, 0
      %p63 = por %p61, %p62
      %p64 = scmp.ne.s32.totalorder %s52, %s53
      %p65 = scmp.eq.s32.totalorder %s22, 1
      %p66 = por %p64, %p65
      %p68 = scmp.ne.s32.totalorder %s53, %s67
      %p69 = scmp.eq.s32.totalorder %s22, 0
      %p70 = por %p68, %p69
      %s72 = sadd.s32 %s71, 1
      %p75 = scmp.eq.s32.totalorder %s16, 1
      %p76 = scmp.ne.s32.totalorder %s71, %s73
      %p77 = scmp.eq.s32.totalorder %s16, 0
      %p78 = por %p76, %p77
      %p79 = scmp.ne.s32.totalorder %s71, %s73
      %p80 = scmp.eq.s32.totalorder %s21, 1
      %p81 = por %p79, %p80
      %p82 = scmp.ne.s32.totalorder %s73, %s74
      %p83 = scmp.eq.s32.totalorder %s21, 0
      %p84 = por %p82, %p83
      %p85 = scmp.ne.s32.totalorder %s73, %s74
      %p86 = scmp.eq.s32.totalorder %s22, 1
      %p87 = por %p85, %p86
      %p89 = scmp.ne.s32.totalorder %s74, %s88
      %p90 = scmp.eq.s32.totalorder %s22, 0
      %p91 = por %p89, %p90
      %s93 = sadd.s32 %s92, 1
      %p96 = scmp.eq.s32.totalorder %s16, 1
      %p97 = scmp.ne.s32.totalorder %s92, %s94
      %p98 = scmp.eq.s32.totalorder %s16, 0
      %p99 = por %p97, %p98
      %p100 = scmp.ne.s32.totalorder %s92, %s94
      %p101 = scmp.eq.s32.totalorder %s21, 1
      %p102 = por %p100, %p101
      %p103 = scmp.ne.s32.totalorder %s94, %s95
      %p104 = scmp.eq.s32.totalorder %s21, 0
      %p105 = por %p103, %p104
      %p106 = scmp.ne.s32.totalorder %s94, %s95
      %p107 = scmp.eq.s32.totalorder %s22, 1
      %p108 = por %p106, %p107
      %p110 = scmp.ne.s32.totalorder %s95, %s109
      %p111 = scmp.eq.s32.totalorder %s22, 0
      %p112 = por %p110, %p111
      %s114 = sadd.s32 %s113, 1
      %p117 = scmp.eq.s32.totalorder %s16, 1
      %p118 = scmp.ne.s32.totalorder %s113, %s115
      %p119 = scmp.eq.s32.totalorder %s16, 0
      %p120 = por %p118, %p119
      %p121 = scmp.ne.s32.totalorder %s113, %s115
      %p122 = scmp.eq.s32.totalorder %s21, 1
      %p123 = por %p121, %p122
      %p124 = scmp.ne.s32.totalorder %s115, %s116
      %p125 = scmp.eq.s32.totalorder %s21, 0
      %p126 = por %p124, %p125
      %p127 = scmp.ne.s32.totalorder %s115, %s116
      %p128 = scmp.eq.s32.totalorder %s22, 1
      %p129 = por %p127, %p128
      %p131 = scmp.ne.s32.totalorder %s116, %s130
      %p132 = scmp.eq.s32.totalorder %s22, 0
      %p133 = por %p131, %p132
      %s135 = sadd.s32 %s134, 1
      %p138 = scmp.eq.s32.totalorder %s16, 1
      %p139 = scmp.ne.s32.totalorder %s134, %s136
      %p140 = scmp.eq.s32.totalorder %s16, 0
      %p141 = por %p139, %p140
      %p142 = scmp.ne.s32.totalorder %s134, %s136
      %p143 = scmp.eq.s32.totalorder %s21, 1
      %p144 = por %p142, %p143
      %p145 = scmp.ne.s32.totalorder %s136, %s137
      %p146 = scmp.eq.s32.totalorder %s21, 0
      %p147 = por %p145, %p146
      %p148 = scmp.ne.s32.totalorder %s136, %s137
      %p149 = scmp.eq.s32.totalorder %s22, 1
      %p150 = por %p148, %p149
      %p152 = scmp.ne.s32.totalorder %s137, %s151
      %p153 = scmp.eq.s32.totalorder %s22, 0
      %p154 = por %p152, %p153
      %s156 = sadd.s32 %s155, 1
      %p159 = scmp.eq.s32.totalorder %s16, 1
      %p160 = scmp.ne.s32.totalorder %s155, %s157
      %p161 = scmp.eq.s32.totalorder %s16, 0
      %p162 = por %p160, %p161
      %p163 = scmp.ne.s32.totalorder %s155, %s157
      %p164 = scmp.eq.s32.totalorder %s21, 1
      %p165 = por %p163, %p164
      %p166 = scmp.ne.s32.totalorder %s157, %s158
      %p167 = scmp.eq.s32.totalorder %s21, 0
      %p168 = por %p166, %p167
      %p169 = scmp.ne.s32.totalorder %s157, %s158
      %p170 = scmp.eq.s32.totalorder %s22, 1
      %p171 = por %p169, %p170
      %p173 = scmp.ne.s32.totalorder %s158, %s172
      %p174 = scmp.eq.s32.totalorder %s22, 0
      %p175 = por %p173, %p174
      %s176 = ssub.s32 %s16, %s23
      %p177 = scmp.eq.s32.totalorder %s176, 0
      %s179 = sadd.s32 %s178, 1
      %s180 = scalar_select %p177, %s178, %s179
      %p183 = pneg %p177
      %p184 = scmp.eq.s32.totalorder %s16, 1
      %p185 = por %p183, %p184
      %p186 = scmp.ne.s32.totalorder %s178, %s181
      %p187 = scmp.eq.s32.totalorder %s16, 0
      %p188 = por %p186, %p187
      %p189 = scmp.ne.s32.totalorder %s178, %s181
      %p190 = scmp.eq.s32.totalorder %s21, 1
      %p191 = por %p189, %p190
      %p192 = scmp.ne.s32.totalorder %s181, %s182
      %p193 = scmp.eq.s32.totalorder %s21, 0
      %p194 = por %p192, %p193
      %p195 = scmp.ne.s32.totalorder %s181, %s182
      %p196 = scmp.eq.s32.totalorder %s22, 1
      %p197 = por %p195, %p196
      %p199 = scmp.ne.s32.totalorder %s182, %s198
      %p200 = scmp.eq.s32.totalorder %s22, 0
      %p201 = por %p199, %p200
      %p202 = scmp.le.s32.totalorder 1, %s16
      %p203 = scmp.lt.s32.totalorder %s16, 3
      %p204 = pnand %p202, %p203
      %p205 = pneg %p204
      // Predicated region
      $region9: #{tpu_custom_call.1} parent=5 // pred_check
        _
      $region10: #{tpu_custom_call.1} parent=5 // pred_check_branch
        %207 = sbr.rel (%p204) target = $region12
      $region11: #{tpu_custom_call.1} parent=5 // pred_region
        %s208 = ssub.s32 %s16, 1
        // Predicated region
        $region13: #{tpu_custom_call.1} parent=11 // pred_check
          %p209 = pneg %p63
        $region14: #{tpu_custom_call.1} parent=11 // pred_check_branch
          %211 = sbr.rel (%p209) target = $region16
        $region15: #{tpu_custom_call.1} parent=11 // pred_region
          _
        $region16: #{tpu_custom_call.1} parent=11 // pred_fallthru
          _
        // Predicated region
        $region17: #{tpu_custom_call.1} parent=11 // pred_check
          %p212 = pneg %p84
        $region18: #{tpu_custom_call.1} parent=11 // pred_check_branch
          %214 = sbr.rel (%p212) target = $region20
        $region19: #{tpu_custom_call.1} parent=11 // pred_region
          _
        $region20: #{tpu_custom_call.1} parent=11 // pred_fallthru
          _
        // Predicated region
        $region21: #{tpu_custom_call.1} parent=11 // pred_check
          %p215 = pneg %p105
        $region22: #{tpu_custom_call.1} parent=11 // pred_check_branch
          %217 = sbr.rel (%p215) target = $region24
        $region23: #{tpu_custom_call.1} parent=11 // pred_region
          _
        $region24: #{tpu_custom_call.1} parent=11 // pred_fallthru
          _
        // Predicated region
        $region25: #{tpu_custom_call.1} parent=11 // pred_check
          %p218 = pneg %p126
        $region26: #{tpu_custom_call.1} parent=11 // pred_check_branch
          %220 = sbr.rel (%p218) target = $region28
        $region27: #{tpu_custom_call.1} parent=11 // pred_region
          _
        $region28: #{tpu_custom_call.1} parent=11 // pred_fallthru
          _
        // Predicated region
        $region29: #{tpu_custom_call.1} parent=11 // pred_check
          %p221 = pneg %p147
        $region30: #{tpu_custom_call.1} parent=11 // pred_check_branch
          %223 = sbr.rel (%p221) target = $region32
        $region31: #{tpu_custom_call.1} parent=11 // pred_region
          _
        $region32: #{tpu_custom_call.1} parent=11 // pred_fallthru
          _
        // Predicated region
        $region33: #{tpu_custom_call.1} parent=11 // pred_check
          %p224 = pneg %p168
        $region34: #{tpu_custom_call.1} parent=11 // pred_check_branch
          %226 = sbr.rel (%p224) target = $region36
        $region35: #{tpu_custom_call.1} parent=11 // pred_region
          _
        $region36: #{tpu_custom_call.1} parent=11 // pred_fallthru
          _
      $region12: #{tpu_custom_call.1} parent=5 // pred_fallthru
        _
      %p227 = scmp.lt.s32.totalorder %s16, 2
      // Predicated region
      $region37: #{tpu_custom_call.1} parent=5 // pred_check
        %p228 = pneg %p227
      $region38: #{tpu_custom_call.1} parent=5 // pred_check_branch
        %230 = sbr.rel (%p228) target = $region40
      $region39: #{tpu_custom_call.1} parent=5 // pred_region
        // Predicated region
        $region41: #{tpu_custom_call.1} parent=39 // pred_check
          %p231 = pneg %p36
        $region42: #{tpu_custom_call.1} parent=39 // pred_check_branch
          %233 = sbr.rel (%p231) target = $region44
        $region43: #{tpu_custom_call.1} parent=39 // pred_region
          %p234 = scmp.lt.s32.totalorder %s16, 1
          %s235 = scalar_select %p234, %s16, 1
          %s236 = smul.addr %s235, 2
          %s237 = smul.addr %s236, 4
          %s238 = scalar_lea.vmem %s0, %s237
        $region44: #{tpu_custom_call.1} parent=39 // pred_fallthru
          _
      $region40: #{tpu_custom_call.1} parent=5 // pred_fallthru
        _
      %p239 = scmp.le.s32.totalorder 1, %s16
      %p240 = scmp.lt.s32.totalorder %s16, 3
      %p241 = pnand %p239, %p240
      %p242 = pneg %p241
      // Predicated region
      $region45: #{tpu_custom_call.1} parent=5 // pred_check
        _
      $region46: #{tpu_custom_call.1} parent=5 // pred_check_branch
        %244 = sbr.rel (%p241) target = $region48
      $region47: #{tpu_custom_call.1} parent=5 // pred_region
        %s245 = ssub.s32 %s16, 1
        %p246 = scmp.lt.s32.totalorder %s21, 1
        %s247 = scalar_select %p246, %s21, 1
        %s248 = smul.addr %s247, 2
        %s249 = smul.addr %s248, 4
        %s250 = scalar_lea.vmem %s0, %s249
        %p251 = pneg %p42
        %p252 = pneg %p39
        %p253 = pneg %p63
        %p254 = pneg %p60
        %p255 = pneg %p84
        %p256 = pneg %p81
        %p257 = pneg %p105
        %p258 = pneg %p102
        %p259 = pneg %p126
        %p260 = pneg %p123
        %p261 = pneg %p147
        %p262 = pneg %p144
        %p263 = pneg %p168
        %p264 = pneg %p165
        %p265 = pneg %p194
        %p266 = pneg %p191
        %s267 = sand.u32 %s181, 1
        %s268 = scalar_lea.sflag [#allocation3], %s267
        %s269 = sand.u32 %s181, 1
        %s270 = smul.addr %s269, 8
        %s271 = scalar_lea.vmem [#allocation2], %s270
        %p272 = scmp.lt.s32.totalorder %s21, 1
        %s273 = scalar_select %p272, %s21, 1
        %s274 = smul.addr %s273, 2
        %s275 = smul.addr %s274, 4
        %s276 = scalar_lea.vmem %s0, %s275
        %v278 = vld [vmem:[%s276] sm:$0xff]
        %v279 = vld [vmem:[%s1] sm:$0xf]
        %v280 = vld [vmem:[%s1 + $0x4] sm:$0xf]
        %v281 = vld [vmem:[%s1 + $0x8] sm:$0xf]
        %v283 = vcombine.high %v278, %v278
        %v285 = vpack.c.bf16 %v278, %v278
        %v286 = vpack.c.bf16 %v283, %v283
        %v287 = vld [vmem:[%s2] sm:$0xff]
        %v288 = vld [vmem:[%s2 + $0x8] sm:$0xff]
        %v289 = vld [vmem:[%s2 + $0x10] sm:$0xff]
        %291 = vset.pattern.permute.xlu0 0
        %292 = vperm.xlu0 %291, %v287
        %v293 = vpop.permute.xlu0 %292
        %296 = vset.pattern.permute.xlu0 0
        %297 = vperm.xlu0 %296, %v288
        %v298 = vpop.permute.xlu0 %297
        %301 = vset.pattern.permute.xlu0 0
        %302 = vperm.xlu0 %301, %v289
        %v303 = vpop.permute.xlu0 %302
        %v308 = vunpack.c.l.b16 %v279
        %v309 = vunpack.c.l.b16 %v280
        %v310 = vunpack.c.l.b16 %v281
        %v311 = vpack.c.b16 %v309, %v308
        %v312 = vpack.c.b16 %v310, %v310
        %vm313 = vcmask 31744
        %v315 = vsel %vm313, %v311, 0
        %v318 = vsel %vm313, %v312, 0
        %vm320 = vcmask 1041408
        %v322 = vsel %vm320, %v285, 0
        %v325 = vsel %vm320, %v286, 0
        %327 = vmatprep.subr.bf16.mxu0 %v325
        %328 = vmatpush1.bf16.msra.mxu0 %v322
        %329 = vmatprep.subr.bf16.mxu0 0
        %330 = vmatpush1.bf16.msra.mxu0 0
        %331 = vmatprep.subr.bf16.mxu0 0
        %332 = vmatpush1.bf16.msra.mxu0 0
        %333 = vmatprep.subr.bf16.mxu0 0
        %334 = vmatpush1.bf16.msra.mxu0 0
        %335 = vmatprep.subr.bf16.mxu0 0
        %336 = vmatpush1.bf16.msra.mxu0 0
        %337 = vmatprep.subr.bf16.mxu0 0
        %338 = vmatpush1.bf16.msra.mxu0 0
        %339 = vmatprep.subr.bf16.mxu0 0
        %340 = vmatpush1.bf16.msra.mxu0 0
        %341 = vmatprep.subr.bf16.mxu0 0
        %342 = vmatpush1.bf16.msra.mxu0 0
        %343 = vmatprep.subr.bf16.mxu0 0
        %344 = vmatpush1.bf16.msra.mxu0 0
        %345 = vmatprep.subr.bf16.mxu0 0
        %346 = vmatpush1.bf16.msra.mxu0 0
        %347 = vmatprep.subr.bf16.mxu0 0
        %348 = vmatpush1.bf16.msra.mxu0 0
        %349 = vmatprep.subr.bf16.mxu0 0
        %350 = vmatpush1.bf16.msra.mxu0 0
        %351 = vmatprep.subr.bf16.mxu0 0
        %352 = vmatpush1.bf16.msra.mxu0 0
        %353 = vmatprep.subr.bf16.mxu0 0
        %354 = vmatpush1.bf16.msra.mxu0 0
        %355 = vmatprep.subr.bf16.mxu0 0
        %356 = vmatpush1.bf16.msra.mxu0 0
        %357 = vmatprep.subr.bf16.mxu0 0
        %358 = vmatpush1.bf16.msra.mxu0 0
        %359 = vmatprep.mubr.bf16.mxu0 0
        %360 = vmatmul.mubr.bf16.gmra.mrb[0].mxu0 %v315
        %v361 = vpop.f32.mrb[0].mxu0
        %v362 = vadd.f32 %v293, %v361
        %v363 = vpop.f32.mrb[0].mxu0
        %v364 = vadd.f32 %v293, %v363
        %v365 = vpop.f32.mrb[0].mxu0
        %v366 = vadd.f32 %v298, %v365
        %v367 = vpop.f32.mrb[0].mxu0
        %v368 = vadd.f32 %v298, %v367
        %369 = vmatprep.mubr.bf16.mxu0 0
        %370 = vmatmul.mubr.bf16.gmra.mrb[0].mxu0 %v318
        %v371 = vpop.f32.mrb[0].mxu0
        %v372 = vadd.f32 %v303, %v371
        %v373 = vpop.f32.mrb[0].mxu0
        %v374 = vadd.f32 %v303, %v373
        %v375 = vpop.f32.mrb[0].mxu0
        %v376 = vpop.f32.mrb[0].mxu0
        %377 = vdwg.mxu0
        %v378 = vmax.f32 %v362, 0.0
        %v379 = vmax.f32 %v364, 0.0
        %v380 = vmax.f32 %v366, 0.0
        %v381 = vmax.f32 %v368, 0.0
        %v382 = vmax.f32 %v372, 0.0
        %v383 = vmax.f32 %v374, 0.0
        %v384 = vlaneseq
        %v385 = vand.u32 %v384, 127
        %v386 = vadd.s32 %v385, 128
        %vm387 = vcmp.lt.s32.totalorder %v385, 0
        %v388 = vsub.s32 0, %v385
        %v389 = vsel %vm387, %v388, %v385
        %v390 = vshrl.u32 %v389, 4
        %v391 = vand.u32 %v389, 15
        %v392 = vsub.s32 0, %v391
        %v393 = vsel %vm387, %v392, %v391
        %vm394 = vcmp.lt.s32.totalorder %v386, 0
        %v395 = vsub.s32 0, %v386
        %v396 = vsel %vm394, %v395, %v386
        %v397 = vshrl.u32 %v396, 4
        %v398 = vand.u32 %v396, 15
        %v399 = vsub.s32 0, %v398
        %v400 = vsel %vm394, %v399, %v398
        %vm401 = vcmp.ne.s32.totalorder %v393, 0
        %vm402 = vcmp.ne.s32.totalorder %v400, 0
        %vm403 = vcmp.lt.s32.totalorder %v393, 0
        %vm404 = vcmp.lt.s32.totalorder %v400, 0
        %vm405 = vmand %vm403, %vm401
        %vm406 = vmand %vm404, %vm402
        %v407 = vadd.s32 %v393, 16
        %v408 = vadd.s32 %v400, 16
        %v409 = vsel %vm405, %v407, %v393
        %v410 = vsel %vm406, %v408, %v400
        %v411 = vld [vmem:[%s3] sm:$0xff]
        %v412 = vld [vmem:[%s3 + $0x8] sm:$0xff]
        %v413 = vld [vmem:[%s3 + $0x10] sm:$0xff]
        %vm414 = vcmp.gt.s32.totalorder %v409, 0
        %vm415 = vcmp.gt.s32.totalorder %v410, 0
        %423 = vrot.lane.b32.xlu0 0.0, 17
        %v424 = vpop.permute.xlu0 %423
        %425 = vrot.lane.b32.xlu0 %v378, 17
        %v426 = vpop.permute.xlu0 %425
        %427 = vrot.lane.b32.xlu0 %v379, 17
        %v428 = vpop.permute.xlu0 %427
        %429 = vrot.lane.b32.xlu0 %v380, 17
        %v430 = vpop.permute.xlu0 %429
        %431 = vrot.lane.b32.xlu0 %v381, 17
        %v432 = vpop.permute.xlu0 %431
        %433 = vrot.lane.b32.xlu0 %v382, 17
        %v434 = vpop.permute.xlu0 %433
        %435 = vrot.lane.b32.xlu0 %v383, 17
        %v436 = vpop.permute.xlu0 %435
        %vm437 = vcmask 138240
        %v438 = vsel %vm437, %v424, %v426
        %v439 = vsel %vm437, %v426, %v428
        %v440 = vsel %vm437, %v424, %v430
        %v441 = vsel %vm437, %v430, %v432
        %v442 = vsel %vm437, %v424, %v434
        %v443 = vsel %vm437, %v434, %v436
        %v450 = vsel %vm414, %v438, 0.0
        %v451 = vsel %vm415, %v439, 0.0
        %v452 = vsel %vm414, %v440, 0.0
        %v453 = vsel %vm415, %v441, 0.0
        %v454 = vsel %vm414, %v442, 0.0
        %v455 = vsel %vm415, %v443, 0.0
        %457 = vset.pattern.permute.xlu0 0
        %458 = vperm.xlu0 %457, %v411
        %v459 = vpop.permute.xlu0 %458
        %462 = vset.pattern.permute.xlu0 0
        %463 = vperm.xlu0 %462, %v412
        %v464 = vpop.permute.xlu0 %463
        %467 = vset.pattern.permute.xlu0 0
        %468 = vperm.xlu0 %467, %v413
        %v469 = vpop.permute.xlu0 %468
        %v471 = vmul.f32 %v450, %v459
        %v472 = vmul.f32 %v451, %v459
        %v473 = vmul.f32 %v452, %v464
        %v474 = vmul.f32 %v453, %v464
        %v475 = vmul.f32 %v454, %v469
        %v476 = vmul.f32 %v455, %v469
        %v477 = vadd.f32 %v471, 0.0
        %v478 = vadd.f32 %v472, 0.0
        %v479 = vadd.f32 %v473, 0.0
        %v480 = vadd.f32 %v474, 0.0
        %v481 = vadd.f32 %v475, 0.0
        %v482 = vadd.f32 %v476, 0.0
        %483 = vset.pattern.permute.xlu0 1
        %484 = vperm.xlu0 %483, %v411
        %v485 = vpop.permute.xlu0 %484
        %487 = vset.pattern.permute.xlu0 1
        %488 = vperm.xlu0 %487, %v412
        %v489 = vpop.permute.xlu0 %488
        %491 = vset.pattern.permute.xlu0 1
        %492 = vperm.xlu0 %491, %v413
        %v493 = vpop.permute.xlu0 %492
        %v495 = vmul.f32 %v485, 0.0
        %v496 = vmul.f32 %v378, %v485
        %v497 = vmul.f32 %v379, %v485
        %v498 = vmul.f32 %v489, 0.0
        %v499 = vmul.f32 %v380, %v489
        %v500 = vmul.f32 %v381, %v489
        %v501 = vmul.f32 %v493, 0.0
        %v502 = vmul.f32 %v382, %v493
        %v503 = vmul.f32 %v383, %v493
        %513 = vrot.lane.b32.xlu0 %v495, 16
        %v514 = vpop.permute.xlu0 %513
        %515 = vrot.lane.b32.xlu0 %v496, 16
        %v516 = vpop.permute.xlu0 %515
        %517 = vrot.lane.b32.xlu0 %v497, 16
        %v518 = vpop.permute.xlu0 %517
        %519 = vrot.lane.b32.xlu0 %v498, 16
        %v520 = vpop.permute.xlu0 %519
        %521 = vrot.lane.b32.xlu0 %v499, 16
        %v522 = vpop.permute.xlu0 %521
        %523 = vrot.lane.b32.xlu0 %v500, 16
        %v524 = vpop.permute.xlu0 %523
        %525 = vrot.lane.b32.xlu0 %v501, 16
        %v526 = vpop.permute.xlu0 %525
        %527 = vrot.lane.b32.xlu0 %v502, 16
        %v528 = vpop.permute.xlu0 %527
        %529 = vrot.lane.b32.xlu0 %v503, 16
        %v530 = vpop.permute.xlu0 %529
        %vm531 = vcmask 130048
        %v532 = vsel %vm531, %v514, %v516
        %v533 = vsel %vm531, %v516, %v518
        %v534 = vsel %vm531, %v520, %v522
        %v535 = vsel %vm531, %v522, %v524
        %v536 = vsel %vm531, %v526, %v528
        %v537 = vsel %vm531, %v528, %v530
        %v544 = vadd.f32 %v477, %v532
        %v545 = vadd.f32 %v478, %v533
        %v546 = vadd.f32 %v479, %v534
        %v547 = vadd.f32 %v480, %v535
        %v548 = vadd.f32 %v481, %v536
        %v549 = vadd.f32 %v482, %v537
        %vm550 = vcmp.lt.s32.totalorder %v409, 15
        %vm551 = vcmp.lt.s32.totalorder %v410, 15
        %552 = vrot.lane.b32.xlu0 0.0, 15
        %v553 = vpop.permute.xlu0 %552
        %554 = vrot.lane.b32.xlu0 %v378, 15
        %v555 = vpop.permute.xlu0 %554
        %556 = vrot.lane.b32.xlu0 %v379, 15
        %v557 = vpop.permute.xlu0 %556
        %558 = vrot.lane.b32.xlu0 %v380, 15
        %v559 = vpop.permute.xlu0 %558
        %560 = vrot.lane.b32.xlu0 %v381, 15
        %v561 = vpop.permute.xlu0 %560
        %562 = vrot.lane.b32.xlu0 %v382, 15
        %v563 = vpop.permute.xlu0 %562
        %564 = vrot.lane.b32.xlu0 %v383, 15
        %v565 = vpop.permute.xlu0 %564
        %vm566 = vcmask 121856
        %v567 = vsel %vm566, %v553, %v555
        %v568 = vsel %vm566, %v555, %v557
        %v569 = vsel %vm566, %v553, %v559
        %v570 = vsel %vm566, %v559, %v561
        %v571 = vsel %vm566, %v553, %v563
        %v572 = vsel %vm566, %v563, %v565
        %v579 = vsel %vm550, %v567, 0.0
        %v580 = vsel %vm551, %v568, 0.0
        %v581 = vsel %vm550, %v569, 0.0
        %v582 = vsel %vm551, %v570, 0.0
        %v583 = vsel %vm550, %v571, 0.0
        %v584 = vsel %vm551, %v572, 0.0
        %585 = vset.pattern.permute.xlu0 2
        %586 = vperm.xlu0 %585, %v411
        %v587 = vpop.permute.xlu0 %586
        %589 = vset.pattern.permute.xlu0 2
        %590 = vperm.xlu0 %589, %v412
        %v591 = vpop.permute.xlu0 %590
        %593 = vset.pattern.permute.xlu0 2
        %594 = vperm.xlu0 %593, %v413
        %v595 = vpop.permute.xlu0 %594
        %v597 = vmul.f32 %v579, %v587
        %v598 = vmul.f32 %v580, %v587
        %v599 = vmul.f32 %v581, %v591
        %v600 = vmul.f32 %v582, %v591
        %v601 = vmul.f32 %v583, %v595
        %v602 = vmul.f32 %v584, %v595
        %v603 = vadd.f32 %v544, %v597
        %v604 = vadd.f32 %v545, %v598
        %v605 = vadd.f32 %v546, %v599
        %v606 = vadd.f32 %v547, %v600
        %v607 = vadd.f32 %v548, %v601
        %v608 = vadd.f32 %v549, %v602
        %609 = vrot.lane.b32.xlu0 0.0, 1
        %v610 = vpop.permute.xlu0 %609
        %611 = vrot.lane.b32.xlu0 %v378, 1
        %v612 = vpop.permute.xlu0 %611
        %613 = vrot.lane.b32.xlu0 %v379, 1
        %v614 = vpop.permute.xlu0 %613
        %615 = vrot.lane.b32.xlu0 %v380, 1
        %v616 = vpop.permute.xlu0 %615
        %617 = vrot.lane.b32.xlu0 %v381, 1
        %v618 = vpop.permute.xlu0 %617
        %619 = vrot.lane.b32.xlu0 %v382, 1
        %v620 = vpop.permute.xlu0 %619
        %621 = vrot.lane.b32.xlu0 %v383, 1
        %v622 = vpop.permute.xlu0 %621
        %vm623 = vcmask 7168
        %v624 = vsel %vm623, %v610, %v612
        %v625 = vsel %vm623, %v612, %v614
        %v626 = vsel %vm623, %v610, %v616
        %v627 = vsel %vm623, %v616, %v618
        %v628 = vsel %vm623, %v610, %v620
        %v629 = vsel %vm623, %v620, %v622
        %v636 = vsel %vm414, %v624, 0.0
        %v637 = vsel %vm415, %v625, 0.0
        %v638 = vsel %vm414, %v626, 0.0
        %v639 = vsel %vm415, %v627, 0.0
        %v640 = vsel %vm414, %v628, 0.0
        %v641 = vsel %vm415, %v629, 0.0
        %642 = vset.pattern.permute.xlu0 3
        %643 = vperm.xlu0 %642, %v411
        %v644 = vpop.permute.xlu0 %643
        %646 = vset.pattern.permute.xlu0 3
        %647 = vperm.xlu0 %646, %v412
        %v648 = vpop.permute.xlu0 %647
        %650 = vset.pattern.permute.xlu0 3
        %651 = vperm.xlu0 %650, %v413
        %v652 = vpop.permute.xlu0 %651
        %v654 = vmul.f32 %v636, %v644
        %v655 = vmul.f32 %v637, %v644
        %v656 = vmul.f32 %v638, %v648
        %v657 = vmul.f32 %v639, %v648
        %v658 = vmul.f32 %v640, %v652
        %v659 = vmul.f32 %v641, %v652
        %v660 = vadd.f32 %v603, %v654
        %v661 = vadd.f32 %v604, %v655
        %v662 = vadd.f32 %v605, %v656
        %v663 = vadd.f32 %v606, %v657
        %v664 = vadd.f32 %v607, %v658
        %v665 = vadd.f32 %v608, %v659
        %666 = vset.pattern.permute.xlu0 4
        %667 = vperm.xlu0 %666, %v411
        %v668 = vpop.permute.xlu0 %667
        %670 = vset.pattern.permute.xlu0 4
        %671 = vperm.xlu0 %670, %v412
        %v672 = vpop.permute.xlu0 %671
        %674 = vset.pattern.permute.xlu0 4
        %675 = vperm.xlu0 %674, %v413
        %v676 = vpop.permute.xlu0 %675
        %v678 = vmul.f32 %v378, %v668
        %v679 = vmul.f32 %v379, %v668
        %v680 = vmul.f32 %v380, %v672
        %v681 = vmul.f32 %v381, %v672
        %v682 = vmul.f32 %v382, %v676
        %v683 = vmul.f32 %v383, %v676
        %v684 = vadd.f32 %v660, %v678
        %v685 = vadd.f32 %v661, %v679
        %v686 = vadd.f32 %v662, %v680
        %v687 = vadd.f32 %v663, %v681
        %v688 = vadd.f32 %v664, %v682
        %v689 = vadd.f32 %v665, %v683
        %690 = vrot.lane.b32.xlu0 %v378, 127
        %v691 = vpop.permute.xlu0 %690
        %692 = vrot.lane.b32.xlu0 %v379, 127
        %v693 = vpop.permute.xlu0 %692
        %694 = vrot.lane.b32.xlu0 0.0, 127
        %v695 = vpop.permute.xlu0 %694
        %696 = vrot.lane.b32.xlu0 %v380, 127
        %v697 = vpop.permute.xlu0 %696
        %698 = vrot.lane.b32.xlu0 %v381, 127
        %v699 = vpop.permute.xlu0 %698
        %700 = vrot.lane.b32.xlu0 %v382, 127
        %v701 = vpop.permute.xlu0 %700
        %702 = vrot.lane.b32.xlu0 %v383, 127
        %v703 = vpop.permute.xlu0 %702
        %vm704 = vcmask 1039360
        %v705 = vsel %vm704, %v691, %v693
        %v706 = vsel %vm704, %v693, %v695
        %v707 = vsel %vm704, %v697, %v699
        %v708 = vsel %vm704, %v699, %v695
        %v709 = vsel %vm704, %v701, %v703
        %v710 = vsel %vm704, %v703, %v695
        %v717 = vsel %vm550, %v705, 0.0
        %v718 = vsel %vm551, %v706, 0.0
        %v719 = vsel %vm550, %v707, 0.0
        %v720 = vsel %vm551, %v708, 0.0
        %v721 = vsel %vm550, %v709, 0.0
        %v722 = vsel %vm551, %v710, 0.0
        %723 = vset.pattern.permute.xlu0 5
        %724 = vperm.xlu0 %723, %v411
        %v725 = vpop.permute.xlu0 %724
        %727 = vset.pattern.permute.xlu0 5
        %728 = vperm.xlu0 %727, %v412
        %v729 = vpop.permute.xlu0 %728
        %731 = vset.pattern.permute.xlu0 5
        %732 = vperm.xlu0 %731, %v413
        %v733 = vpop.permute.xlu0 %732
        %v735 = vmul.f32 %v717, %v725
        %v736 = vmul.f32 %v718, %v725
        %v737 = vmul.f32 %v719, %v729
        %v738 = vmul.f32 %v720, %v729
        %v739 = vmul.f32 %v721, %v733
        %v740 = vmul.f32 %v722, %v733
        %v741 = vadd.f32 %v684, %v735
        %v742 = vadd.f32 %v685, %v736
        %v743 = vadd.f32 %v686, %v737
        %v744 = vadd.f32 %v687, %v738
        %v745 = vadd.f32 %v688, %v739
        %v746 = vadd.f32 %v689, %v740
        %747 = vrot.lane.b32.xlu0 %v378, 113
        %v748 = vpop.permute.xlu0 %747
        %749 = vrot.lane.b32.xlu0 %v379, 113
        %v750 = vpop.permute.xlu0 %749
        %751 = vrot.lane.b32.xlu0 0.0, 113
        %v752 = vpop.permute.xlu0 %751
        %753 = vrot.lane.b32.xlu0 %v380, 113
        %v754 = vpop.permute.xlu0 %753
        %755 = vrot.lane.b32.xlu0 %v381, 113
        %v756 = vpop.permute.xlu0 %755
        %757 = vrot.lane.b32.xlu0 %v382, 113
        %v758 = vpop.permute.xlu0 %757
        %759 = vrot.lane.b32.xlu0 %v383, 113
        %v760 = vpop.permute.xlu0 %759
        %vm761 = vcmask 924672
        %v762 = vsel %vm761, %v748, %v750
        %v763 = vsel %vm761, %v750, %v752
        %v764 = vsel %vm761, %v754, %v756
        %v765 = vsel %vm761, %v756, %v752
        %v766 = vsel %vm761, %v758, %v760
        %v767 = vsel %vm761, %v760, %v752
        %v774 = vsel %vm414, %v762, 0.0
        %v775 = vsel %vm415, %v763, 0.0
        %v776 = vsel %vm414, %v764, 0.0
        %v777 = vsel %vm415, %v765, 0.0
        %v778 = vsel %vm414, %v766, 0.0
        %v779 = vsel %vm415, %v767, 0.0
        %780 = vset.pattern.permute.xlu0 6
        %781 = vperm.xlu0 %780, %v411
        %v782 = vpop.permute.xlu0 %781
        %784 = vset.pattern.permute.xlu0 6
        %785 = vperm.xlu0 %784, %v412
        %v786 = vpop.permute.xlu0 %785
        %788 = vset.pattern.permute.xlu0 6
        %789 = vperm.xlu0 %788, %v413
        %v790 = vpop.permute.xlu0 %789
        %v792 = vmul.f32 %v774, %v782
        %v793 = vmul.f32 %v775, %v782
        %v794 = vmul.f32 %v776, %v786
        %v795 = vmul.f32 %v777, %v786
        %v796 = vmul.f32 %v778, %v790
        %v797 = vmul.f32 %v779, %v790
        %v798 = vadd.f32 %v741, %v792
        %v799 = vadd.f32 %v742, %v793
        %v800 = vadd.f32 %v743, %v794
        %v801 = vadd.f32 %v744, %v795
        %v802 = vadd.f32 %v745, %v796
        %v803 = vadd.f32 %v746, %v797
        %804 = vset.pattern.permute.xlu0 7
        %805 = vperm.xlu0 %804, %v411
        %v806 = vpop.permute.xlu0 %805
        %808 = vset.pattern.permute.xlu0 7
        %809 = vperm.xlu0 %808, %v412
        %v810 = vpop.permute.xlu0 %809
        %812 = vset.pattern.permute.xlu0 7
        %813 = vperm.xlu0 %812, %v413
        %v814 = vpop.permute.xlu0 %813
        %v816 = vmul.f32 %v378, %v806
        %v817 = vmul.f32 %v379, %v806
        %v818 = vmul.f32 %v806, 0.0
        %v819 = vmul.f32 %v380, %v810
        %v820 = vmul.f32 %v381, %v810
        %v821 = vmul.f32 %v810, 0.0
        %v822 = vmul.f32 %v382, %v814
        %v823 = vmul.f32 %v383, %v814
        %v824 = vmul.f32 %v814, 0.0
        %834 = vrot.lane.b32.xlu0 %v816, 112
        %v835 = vpop.permute.xlu0 %834
        %836 = vrot.lane.b32.xlu0 %v817, 112
        %v837 = vpop.permute.xlu0 %836
        %838 = vrot.lane.b32.xlu0 %v818, 112
        %v839 = vpop.permute.xlu0 %838
        %840 = vrot.lane.b32.xlu0 %v819, 112
        %v841 = vpop.permute.xlu0 %840
        %842 = vrot.lane.b32.xlu0 %v820, 112
        %v843 = vpop.permute.xlu0 %842
        %844 = vrot.lane.b32.xlu0 %v821, 112
        %v845 = vpop.permute.xlu0 %844
        %846 = vrot.lane.b32.xlu0 %v822, 112
        %v847 = vpop.permute.xlu0 %846
        %848 = vrot.lane.b32.xlu0 %v823, 112
        %v849 = vpop.permute.xlu0 %848
        %850 = vrot.lane.b32.xlu0 %v824, 112
        %v851 = vpop.permute.xlu0 %850
        %vm852 = vcmask 916480
        %v853 = vsel %vm852, %v835, %v837
        %v854 = vsel %vm852, %v837, %v839
        %v855 = vsel %vm852, %v841, %v843
        %v856 = vsel %vm852, %v843, %v845
        %v857 = vsel %vm852, %v847, %v849
        %v858 = vsel %vm852, %v849, %v851
        %v865 = vadd.f32 %v798, %v853
        %v866 = vadd.f32 %v799, %v854
        %v867 = vadd.f32 %v800, %v855
        %v868 = vadd.f32 %v801, %v856
        %v869 = vadd.f32 %v802, %v857
        %v870 = vadd.f32 %v803, %v858
        %871 = vrot.lane.b32.xlu0 %v378, 111
        %v872 = vpop.permute.xlu0 %871
        %873 = vrot.lane.b32.xlu0 %v379, 111
        %v874 = vpop.permute.xlu0 %873
        %875 = vrot.lane.b32.xlu0 0.0, 111
        %v876 = vpop.permute.xlu0 %875
        %877 = vrot.lane.b32.xlu0 %v380, 111
        %v878 = vpop.permute.xlu0 %877
        %879 = vrot.lane.b32.xlu0 %v381, 111
        %v880 = vpop.permute.xlu0 %879
        %881 = vrot.lane.b32.xlu0 %v382, 111
        %v882 = vpop.permute.xlu0 %881
        %883 = vrot.lane.b32.xlu0 %v383, 111
        %v884 = vpop.permute.xlu0 %883
        %vm885 = vcmask 908288
        %v886 = vsel %vm885, %v872, %v874
        %v887 = vsel %vm885, %v874, %v876
        %v888 = vsel %vm885, %v878, %v880
        %v889 = vsel %vm885, %v880, %v876
        %v890 = vsel %vm885, %v882, %v884
        %v891 = vsel %vm885, %v884, %v876
        %v898 = vsel %vm550, %v886, 0.0
        %v899 = vsel %vm551, %v887, 0.0
        %v900 = vsel %vm550, %v888, 0.0
        %v901 = vsel %vm551, %v889, 0.0
        %v902 = vsel %vm550, %v890, 0.0
        %v903 = vsel %vm551, %v891, 0.0
        %904 = vset.pattern.permute.xlu0 8
        %905 = vperm.xlu0 %904, %v411
        %v906 = vpop.permute.xlu0 %905
        %908 = vset.pattern.permute.xlu0 8
        %909 = vperm.xlu0 %908, %v412
        %v910 = vpop.permute.xlu0 %909
        %912 = vset.pattern.permute.xlu0 8
        %913 = vperm.xlu0 %912, %v413
        %v914 = vpop.permute.xlu0 %913
        %v916 = vmul.f32 %v898, %v906
        %v917 = vmul.f32 %v899, %v906
        %v918 = vmul.f32 %v900, %v910
        %v919 = vmul.f32 %v901, %v910
        %v920 = vmul.f32 %v902, %v914
        %v921 = vmul.f32 %v903, %v914
        %v922 = vadd.f32 %v865, %v916
        %v923 = vadd.f32 %v866, %v917
        %v924 = vadd.f32 %v867, %v918
        %v925 = vadd.f32 %v868, %v919
        %v926 = vadd.f32 %v869, %v920
        %v927 = vadd.f32 %v870, %v921
        %v928 = vld [vmem:[%s4] sm:$0xff]
        %v929 = vld [vmem:[%s4 + $0x8] sm:$0xff]
        %v930 = vld [vmem:[%s4 + $0x10] sm:$0xff]
        %932 = vset.pattern.permute.xlu0 0
        %933 = vperm.xlu0 %932, %v928
        %v934 = vpop.permute.xlu0 %933
        %937 = vset.pattern.permute.xlu0 0
        %938 = vperm.xlu0 %937, %v929
        %v939 = vpop.permute.xlu0 %938
        %942 = vset.pattern.permute.xlu0 0
        %943 = vperm.xlu0 %942, %v930
        %v944 = vpop.permute.xlu0 %943
        %v946 = vadd.f32 %v922, %v934
        %v947 = vadd.f32 %v923, %v934
        %v948 = vadd.f32 %v924, %v939
        %v949 = vadd.f32 %v925, %v939
        %v950 = vadd.f32 %v926, %v944
        %v951 = vadd.f32 %v927, %v944
        %v952 = vmax.f32 %v946, 0.0
        %v953 = vmax.f32 %v947, 0.0
        %v954 = vmax.f32 %v948, 0.0
        %v955 = vmax.f32 %v949, 0.0
        %v956 = vmax.f32 %v950, 0.0
        %v957 = vmax.f32 %v951, 0.0
        %v958 = vld [vmem:[%s5] sm:$0x3]
        %v959 = vpack.c.bf16 %v954, %v952
        %v960 = vpack.c.bf16 %v955, %v953
        %v961 = vpack.c.bf16 %v956, %v956
        %v962 = vpack.c.bf16 %v957, %v957
        %v963 = vld [vmem:[%s6] sm:$0xf]
        %965 = vset.pattern.permute.xlu0 0
        %966 = vperm.xlu0 %965, %v963
        %v967 = vpop.permute.xlu0 %966
        %vm969 = vcmask 195584
        %v971 = vsel %vm969, %v958, 0
        %vm973 = vcmask 1043456
        %v975 = vsel %vm973, %v961, 0
        %v978 = vsel %vm973, %v962, 0
        %980 = vmatprep.subr.bf16.mxu0 %v960
        %981 = vmatpush1.bf16.msra.mxu0 %v959
        %982 = vmatprep.subr.bf16.mxu0 %v978
        %983 = vmatpush1.bf16.msra.mxu0 %v975
        %984 = vmatprep.subr.bf16.mxu0 0
        %985 = vmatpush1.bf16.msra.mxu0 0
        %986 = vmatprep.subr.bf16.mxu0 0
        %987 = vmatpush1.bf16.msra.mxu0 0
        %988 = vmatprep.subr.bf16.mxu0 0
        %989 = vmatpush1.bf16.msra.mxu0 0
        %990 = vmatprep.subr.bf16.mxu0 0
        %991 = vmatpush1.bf16.msra.mxu0 0
        %992 = vmatprep.subr.bf16.mxu0 0
        %993 = vmatpush1.bf16.msra.mxu0 0
        %994 = vmatprep.subr.bf16.mxu0 0
        %995 = vmatpush1.bf16.msra.mxu0 0
        %996 = vmatprep.subr.bf16.mxu0 0
        %997 = vmatpush1.bf16.msra.mxu0 0
        %998 = vmatprep.subr.bf16.mxu0 0
        %999 = vmatpush1.bf16.msra.mxu0 0
        %1000 = vmatprep.subr.bf16.mxu0 0
        %1001 = vmatpush1.bf16.msra.mxu0 0
        %1002 = vmatprep.subr.bf16.mxu0 0
        %1003 = vmatpush1.bf16.msra.mxu0 0
        %1004 = vmatprep.subr.bf16.mxu0 0
        %1005 = vmatpush1.bf16.msra.mxu0 0
        %1006 = vmatprep.subr.bf16.mxu0 0
        %1007 = vmatpush1.bf16.msra.mxu0 0
        %1008 = vmatprep.subr.bf16.mxu0 0
        %1009 = vmatpush1.bf16.msra.mxu0 0
        %1010 = vmatprep.subr.bf16.mxu0 0
        %1011 = vmatpush1.bf16.msra.mxu0 0
        %1012 = vmatprep.mubr.bf16.mxu0 0
        %1013 = vmatmul.mubr.bf16.gmra.mrb[0].mxu0 %v971
        %v1014 = vpop.f32.mrb[0].mxu0
        %v1015 = vadd.f32 %v967, %v1014
        %v1016 = vpop.f32.mrb[0].mxu0
        %v1017 = vadd.f32 %v967, %v1016
        %v1018 = vpop.f32.mrb[0].mxu0
        %v1019 = vpop.f32.mrb[0].mxu0
        %1020 = vdwg.mxu0
        %v1021 = vmax.f32 %v1015, 0.0
        %v1022 = vmax.f32 %v1017, 0.0
        %v1023 = vadd.f32 %v1021, %v278
        %v1024 = vadd.f32 %v1022, %v283
        %v1027 = vcombine.low %v1023, %v1024
        %1029 = vst [vmem:[%s271] sm:$0xff] %v1027
        %s1030 = sand.u32 %s181, 1
        %s1031 = scalar_lea.sflag [#allocation3], %s1030
        %s1032 = sand.u32 %s181, 1
        %s1033 = smul.addr %s1032, 8
        %s1034 = scalar_lea.vmem [#allocation2], %s1033
        // Predicated region
        $region49: #{tpu_custom_call.1} parent=47 // pred_check
          %p1035 = pneg %p191
        $region50: #{tpu_custom_call.1} parent=47 // pred_check_branch
          %1037 = sbr.rel (%p1035) target = $region52
        $region51: #{tpu_custom_call.1} parent=47 // pred_region
          %s1039 = ssub.s32 128, 128
          %1040 = vsyncadd %s1031, %s1039
          %s1041 = smul.addr %s21, 2
          %s1042 = smul.addr %s1041, 64
          %s1043 = scalar_lea.hbm %s7, %s1042
          %s1045 = sshll.u32 %s1034, 4
          %s1046 = int_to_ptr.vmem [resolvable:$true] %s1045
          %1048 = dma.vmem_to_hbm [thread:$0]  %s1046, 128, %s1043, %s1031
        $region52: #{tpu_custom_call.1} parent=47 // pred_fallthru
          _
      $region48: #{tpu_custom_call.1} parent=5 // pred_fallthru
        _
      %p1049 = scmp.le.s32.totalorder 2, %s16
      // Predicated region
      $region53: #{tpu_custom_call.1} parent=5 // pred_check
        %p1050 = pneg %p1049
      $region54: #{tpu_custom_call.1} parent=5 // pred_check_branch
        %1052 = sbr.rel (%p1050) target = $region56
      $region55: #{tpu_custom_call.1} parent=5 // pred_region
        %s1053 = ssub.s32 %s16, 2
        // Predicated region
        $region57: #{tpu_custom_call.1} parent=55 // pred_check
          %p1054 = pneg %p197
        $region58: #{tpu_custom_call.1} parent=55 // pred_check_branch
          %1056 = sbr.rel (%p1054) target = $region60
        $region59: #{tpu_custom_call.1} parent=55 // pred_region
          %s1057 = sand.u32 %s182, 1
          %s1058 = scalar_lea.sflag [#allocation3], %s1057
          %s1059 = sand.u32 %s182, 1
          %s1060 = smul.addr %s1059, 8
          %s1061 = scalar_lea.vmem [#allocation2], %s1060
          %1062 = dma.done %s1058, 128
        $region60: #{tpu_custom_call.1} parent=55 // pred_fallthru
          _
      $region56: #{tpu_custom_call.1} parent=5 // pred_fallthru
        _
    $region6: #{tpu_custom_call.1} parent=1 // loop_footer
      %s20 = sadd.s32 1, %s16
    $region7: #{tpu_custom_call.1} parent=1 // loop_footer_branch
      %15 = sbr.rel target = $region3
    $region8: #{tpu_custom_call.1} parent=1 // loop_exit
      _
    %1063 = vsyncpa [#allocation3], 1
    %s1064 = scalar_lea.sflag [#allocation3], 1
    %1065 = vsyncpa %s1064, 1

</llo_original>
